<compile_context>
chip_gen: v7x
topology: tpu7x:2x2x1
jax: 0.10.0
libtpu: 0.0.40
codegen_flags: <defaults>
</compile_context>

<pallas_src>
import jax
import jax.numpy as jnp
from jax import lax
from jax.experimental import pallas as pl
from jax.experimental.pallas import tpu as pltpu


def _attention_kernel(x_ref, w_ref, o_ref):
    # x_ref: (BT, S, H) block of gru_output (BT batch rows)
    # w_ref: (1, H) attention weight (nn.Linear(H, 1, bias=False))
    # o_ref: (BT, H) lane-dense output block
    bt, s, h = x_ref.shape
    x = x_ref[...]                       # keep native dtype (bf16 stays bf16)
    w = w_ref[...]                       # (1, H)

    # f32 inputs -> full-accuracy MXU passes (hidden under DMA, matches the f32
    # reference); bf16 inputs -> native single pass.
    prec = (lax.Precision.HIGHEST if x.dtype == jnp.float32
            else lax.Precision.DEFAULT)

    # --- scores = Linear(H -> 1, no bias), on the MXU -----------------------
    x2d = x.reshape(bt * s, h)           # leading-dim merge: layout no-op
    scores = lax.dot_general(
        x2d, w,
        dimension_numbers=(((1,), (1,)), ((), ())),
        preferred_element_type=jnp.float32,
        precision=prec,
    )                                    # (BT*S, 1) f32
    # small relayout (BT*S f32 scalars) into the softmax-friendly layout
    scores = scores.reshape(bt, s)       # (BT, S)

    # --- softmax numerator over the sequence axis (f32) ---------------------
    m = jnp.max(scores, axis=-1, keepdims=True)       # (BT, 1)
    e = jnp.exp(scores - m)                            # (BT, S)
    denom = jnp.sum(e, axis=-1, keepdims=True)         # (BT, 1)

    # --- sum_s p[b,s] * x[b,s,:] as a batched matvec on the MXU -------------
    # probabilities cast to the input dtype (flash-attention style); exact
    # normalization applied afterwards on the small (BT, H) result.
    num = jnp.einsum('bqs,bsh->bqh',
                     e.astype(x.dtype).reshape(bt, 1, s), x,
                     preferred_element_type=jnp.float32,
                     precision=prec)                    # (BT, 1, H) f32
    o_ref[...] = (num.reshape(bt, h) / denom).astype(o_ref.dtype)


def _pick_block_batch(B, S, H, in_dtype, out_dtype, target_bytes=8 << 20):
    """Batch rows per grid step so one input tile is ~8 MiB (double-buffered it
    stays well under every generation's scoped-VMEM limit once raised), rounded
    to a sublane-pack multiple of the output dtype so output stores are unmasked."""
    in_item = jnp.dtype(in_dtype).itemsize
    bt = max(1, target_bytes // (S * H * in_item))
    if bt >= B:
        return B                                   # single step: block == full array
    mult = 8 * max(1, 4 // jnp.dtype(out_dtype).itemsize)   # f32:8, bf16:16, int8:32
    bt = max(mult, (bt // mult) * mult)
    return B if bt >= B else bt


def attention_forward(gru_output, attn_weight, final_hidden_state=None, *,
                      block_batch=None, vmem_limit_bytes=48 * 1024 * 1024):
    """gru_output: (B, S, H); attn_weight: (1, H) -> (B, H).

    final_hidden_state is accepted for signature parity with the PyTorch module
    but is unused by its forward pass."""
    B, S, H = gru_output.shape
    out_dtype = gru_output.dtype
    bt = (block_batch if block_batch is not None
          else _pick_block_batch(B, S, H, gru_output.dtype, out_dtype))
    n_blocks = pl.cdiv(B, bt)

    in_item = jnp.dtype(gru_output.dtype).itemsize
    out_item = jnp.dtype(out_dtype).itemsize
    cost = pl.CostEstimate(
        flops=4 * B * S * H,
        transcendentals=B * S,
        bytes_accessed=B * S * H * in_item + B * H * out_item + H * in_item,
    )

    # Note: if B % bt != 0, the ragged tail block reads unspecified rows past B;
    # every computation is per-batch-row, so garbage stays confined to rows that
    # are dropped on the (masked) out-of-bounds writeback.
    return pl.pallas_call(
        _attention_kernel,
        out_shape=jax.ShapeDtypeStruct((B, H), out_dtype),
        grid_spec=pltpu.PrefetchScalarGridSpec(
            num_scalar_prefetch=0,
            grid=(n_blocks,),
            in_specs=[
                pl.BlockSpec((bt, S, H), lambda b: (b, 0, 0)),
                pl.BlockSpec((1, H), lambda b: (0, 0)),
            ],
            out_specs=pl.BlockSpec((bt, H), lambda b: (b, 0)),
        ),
        compiler_params=pltpu.CompilerParams(
            # batch-chunk axis is embarrassingly parallel -> shardable across TCs
            dimension_semantics=("parallel",),
            vmem_limit_bytes=vmem_limit_bytes,
        ),
        cost_estimate=cost,
    )(gru_output, attn_weight)


def attention_reference(gru_output, attn_weight):
    # pure-JAX reference mirroring the PyTorch forward (HIGHEST precision so the
    # comparison is against f32-accurate math).
    scores = jnp.einsum("bsh,h->bs", gru_output, attn_weight[0],
                        precision=lax.Precision.HIGHEST)
    p = jax.nn.softmax(scores, axis=1)
    return jnp.einsum("bsh,bs->bh", gru_output, p,
                      precision=lax.Precision.HIGHEST)


if __name__ == "__main__":
    key = jax.random.PRNGKey(0)
    B, S, H = 2, 8, 32

    k1, k2, k3 = jax.random.split(key, 3)
    gru_output = jax.random.normal(k1, (B, S, H), dtype=jnp.float32)
    final_hidden_state = jax.random.normal(k2, (B, H), dtype=jnp.float32)  # unused by forward
    # nn.Linear(hidden_dim, 1, bias=False) weight: shape (1, H), deterministic init
    attn_weight = (jax.random.uniform(k3, (1, H), dtype=jnp.float32) - 0.5) * (2.0 / jnp.sqrt(H))

    out = attention_forward(gru_output, attn_weight, final_hidden_state)
    out = jax.block_until_ready(out)

    ref = attention_reference(gru_output, attn_weight)
    assert out.shape == (B, H)
    err = float(jnp.max(jnp.abs(out - ref)))
    assert jnp.allclose(out, ref, atol=1e-4, rtol=1e-4), err

    print("KERNEL_OK")
</pallas_src>

<mosaic_0001>
module attributes {stable_mosaic.version = 11 : i64} {
  func.func @_attention_kernel(%arg0: i32, %arg1: memref<2x8x32xf32, #tpu.memory_space<vmem>>, %arg2: memref<1x32xf32, #tpu.memory_space<vmem>>, %arg3: memref<2x32xf32, #tpu.memory_space<vmem>>) attributes {dimension_semantics = [#tpu.dimension_semantics<parallel>], iteration_bounds = array<i64: 1>, scalar_prefetch = 0 : i64, scratch_operands = 0 : i64, tpu.core_type = #tpu.core_type<tc>, window_params = [{transform_indices = @transform_0, window_bounds = array<i64: 2, 8, 32>}, {pipeline_mode = #tpu.pipeline_mode<synchronous>, transform_indices = @transform_1, window_bounds = array<i64: 1, 32>}, {transform_indices = @transform_2, window_bounds = array<i64: 2, 32>}]} {
    %c0 = arith.constant 0 : index
    %c0_0 = arith.constant 0 : index
    %c0_1 = arith.constant 0 : index
    %0 = vector.load %arg1[%c0, %c0_0, %c0_1] : memref<2x8x32xf32, #tpu.memory_space<vmem>>, vector<2x8x32xf32>
    %c0_2 = arith.constant 0 : index
    %c0_3 = arith.constant 0 : index
    %1 = vector.load %arg2[%c0_2, %c0_3] : memref<1x32xf32, #tpu.memory_space<vmem>>, vector<1x32xf32>
    %2 = vector.shape_cast %0 : vector<2x8x32xf32> to vector<16x32xf32>
    %cst = arith.constant dense<0.000000e+00> : vector<16x1xf32>
    %3 = tpu.matmul %2, %1, %cst {dimension_numbers = #tpu.dot_dimension_numbers<[1], [1], [0], [0], [0, 0, 1, 0], [], []>, precision = #tpu.contract_precision<fp32>} : vector<16x32xf32>, vector<1x32xf32>, vector<16x1xf32> -> vector<16x1xf32>
    %4 = vector.shape_cast %3 : vector<16x1xf32> to vector<2x8xf32>
    %cst_4 = arith.constant dense<0xFF800000> : vector<2xf32>
    %5 = vector.multi_reduction <maximumf>, %4, %cst_4 [1] : vector<2x8xf32> to vector<2xf32>
    %6 = vector.shape_cast %5 : vector<2xf32> to vector<2x1xf32>
    %7 = vector.broadcast %6 : vector<2x1xf32> to vector<2x8xf32>
    %8 = arith.subf %4, %7 : vector<2x8xf32>
    %9 = math.exp %8 : vector<2x8xf32>
    %cst_5 = arith.constant dense<0.000000e+00> : vector<2xf32>
    %10 = vector.multi_reduction <add>, %9, %cst_5 [1] : vector<2x8xf32> to vector<2xf32>
    %11 = vector.shape_cast %10 : vector<2xf32> to vector<2x1xf32>
    %12 = vector.shape_cast %9 : vector<2x8xf32> to vector<2x1x8xf32>
    "tpu.trace_start"() <{level = 10 : i32, message = "bqs,bsh->bqh"}> : () -> ()
    %cst_6 = arith.constant dense<0.000000e+00> : vector<2x1x32xf32>
    %13 = tpu.matmul %12, %0, %cst_6 {dimension_numbers = #tpu.dot_dimension_numbers<[2], [1], [1], [2], [0, 0, 0, 1, 1, 2], [0], [0]>, precision = #tpu.contract_precision<fp32>} : vector<2x1x8xf32>, vector<2x8x32xf32>, vector<2x1x32xf32> -> vector<2x1x32xf32>
    "tpu.trace_stop"() : () -> ()
    %14 = vector.shape_cast %13 : vector<2x1x32xf32> to vector<2x32xf32>
    %15 = vector.broadcast %11 : vector<2x1xf32> to vector<2x32xf32>
    %16 = arith.divf %14, %15 : vector<2x32xf32>
    %c0_7 = arith.constant 0 : index
    %c0_8 = arith.constant 0 : index
    %17 = vector.load %arg3[%c0_7, %c0_8] : memref<2x32xf32, #tpu.memory_space<vmem>>, vector<2x32xf32>
    tpu.vector_store %arg3[%c0_7, %c0_8], %16 {strides = array<i32>} : memref<2x32xf32, #tpu.memory_space<vmem>>, vector<2x32xf32>,
    return
  }
  func.func @transform_0(%arg0: i32) -> (i32, i32, i32) {
    %c0_i32 = arith.constant 0 : i32
    %c0_i32_0 = arith.constant 0 : i32
    %c0_i32_1 = arith.constant 0 : i32
    return %arg0, %c0_i32, %c0_i32_0 : i32, i32, i32
  }
  func.func @transform_1(%arg0: i32) -> (i32, i32) {
    %c0_i32 = arith.constant 0 : i32
    %c0_i32_0 = arith.constant 0 : i32
    %c0_i32_1 = arith.constant 0 : i32
    return %c0_i32, %c0_i32_0 : i32, i32
  }
  func.func @transform_2(%arg0: i32) -> (i32, i32) {
    %c0_i32 = arith.constant 0 : i32
    %c0_i32_0 = arith.constant 0 : i32
    return %arg0, %c0_i32 : i32, i32
  }
}

</mosaic_0001>

<llo_original>
// kernel: tpu_custom_call.1
$region0: #{tpu_custom_call.1}
  #allocation0 [shape = 'u32[]', space=smem, size = 0x4, offset = 0x4, fixed_abs, tag = 'smem constant byte address 0x4 - core index']
  #allocation1 [shape = 'u32[144,128]{1,0:T(1,128)}', space=vmem, size = 0x12000, scoped, tag = 'internal scratch']
  %s0 = inlined_call_operand.hbm [shape: f32[2,8,32], index: 0, kind: input, shape index: {}]
  %s1 = inlined_call_operand.vmem [shape: f32[1,32], index: 1, kind: input, shape index: {}]
  %s2 = inlined_call_operand.hbm [shape: f32[2,32], index: 2, kind: output, shape index: {}]
  %s3 = sld [smem:[#allocation0]]
  $region22: #{tpu_custom_call.1} parent=0
    _
  %s5 = ssub.s32 1, %s3
  %s6 = scalar_select 0, %s5, %s3
  $region1: #{tpu_custom_call.1} parent=0
    #allocation2 [shape = 'u8[8192]{0}', space=vmem, size = 0x2000, scoped, tag = 'input window, operand 0, single buffered']
    #allocation3 [shape = 's32[1]{0}', space=sflag, size = 0x4, scoped, tag = 'scoped memory for tpu_custom_call.1']
    #allocation4 [shape = 's32[1]{0}', space=sflag, size = 0x4, scoped, tag = 'scoped memory for tpu_custom_call.1']
    #allocation5 [shape = 'u8[1024]{0}', space=vmem, size = 0x400, scoped, tag = 'output window, operand 0, single buffered']
    %7 = vsyncpa [#allocation3], 0
    %8 = vsyncpa [#allocation4], 0
    // Predicated region
    $region2: #{tpu_custom_call.1} parent=1 // pred_check
      _
    $region3: #{tpu_custom_call.1} parent=1 // pred_check_branch
      %10 = sbr.rel (0) target = $region5
    $region4: #{tpu_custom_call.1} parent=1 // pred_region
      %s12 = ssub.s32 256, 256
      %13 = vsyncadd [#allocation3], %s12
      %s14 = sshll.u32 [#allocation2], 4
      %s15 = int_to_ptr.vmem [resolvable:$true] %s14
      %20 = dma.hbm_to_vmem [thread:$0]  %s0, 256, %s15, [#allocation3], 128, 128, 8
    $region5: #{tpu_custom_call.1} parent=1 // pred_fallthru
      _
    // Predicated region
    $region6: #{tpu_custom_call.1} parent=1 // pred_check
      _
    $region7: #{tpu_custom_call.1} parent=1 // pred_check_branch
      %22 = sbr.rel (0) target = $region9
    $region8: #{tpu_custom_call.1} parent=1 // pred_region
      _
    $region9: #{tpu_custom_call.1} parent=1 // pred_fallthru
      _
    // Predicated region
    $region10: #{tpu_custom_call.1} parent=1 // pred_check
      _
    $region11: #{tpu_custom_call.1} parent=1 // pred_check_branch
      %24 = sbr.rel (0) target = $region13
    $region12: #{tpu_custom_call.1} parent=1 // pred_region
      %25 = dma.done [#allocation3], 256
    $region13: #{tpu_custom_call.1} parent=1 // pred_fallthru
      _
    %v26 = vld [vmem:[#allocation2] sm:$0xff]
    %v27 = vld [vmem:[#allocation2 + $0x8] sm:$0xff]
    %v28 = vld [vmem:[%s1] sm:$0x1]
    %v30 = vlaneseq
    %v31 = vshrl.u32 %v30, 7
    %v32 = vsub.s32 0, %v31
    %v33 = vrot.slane %v28, %v32
    %v35 = vmul.f32 %v26, %v33
    %v36 = vmul.f32 %v27, %v33
    %vm37 = vcmask 261120
    %v38 = vsel %vm37, %v35, 0.0
    %39 = vadd.xlane.f32.xlu0 %v38
    %v40 = vpop.xlane.xlu0 %39
    %v41 = vsel %vm37, %v36, 0.0
    %42 = vadd.xlane.f32.xlu0 %v41
    %v43 = vpop.xlane.xlu0 %42
    %v46 = vlaneseq
    %v47 = vand.u32 %v46, 127
    %v48 = vlaneseq
    %v49 = vshrl.u32 %v48, 7
    %v50 = vsub.s32 %v47, %v49
    %v51 = vrot.slane %v40, %v50
    %v52 = vlaneseq
    %v53 = vshrl.u32 %v52, 7
    %v54 = vsub.s32 %v47, %v53
    %v55 = vrot.slane %v43, %v54
    %vm56 = vcmask 1041409
    %v57 = vsel %vm56, %v55, %v51
    %vm59 = vcmask 58368
    %v60 = vsel %vm59, %v57, -inf
    %61 = vmax.xlane.f32.xlu0 %v60
    %v62 = vpop.xlane.xlu0 %61
    %v64 = vlaneseq
    %v65 = vshrl.u32 %v64, 7
    %v66 = vsub.s32 0, %v65
    %v67 = vrot.slane %v62, %v66
    %v68 = vlaneseq
    %v69 = vshrl.u32 %v68, 7
    %v70 = vsub.s32 1, %v69
    %v71 = vrot.slane %v62, %v70
    %v74 = vsub.f32 %v40, %v67
    %v75 = vsub.f32 %v43, %v71
    %v76 = vmul.f32 %v74, 1.442695
    %v77 = vpow.pop %v76
    %v78 = vmul.f32 %v75, 1.442695
    %v79 = vpow.pop %v78
    %82 = vset.pattern.permute.xlu0 0
    %83 = vperm.xlu0 %82, %v77
    %v84 = vpop.permute.xlu0 %83
    %85 = vset.pattern.permute.xlu0 0
    %86 = vperm.xlu0 %85, %v79
    %v87 = vpop.permute.xlu0 %86
    %v88 = vlaneseq
    %v89 = vshrl.u32 %v88, 7
    %v90 = vsub.s32 %v47, %v89
    %v91 = vrot.slane %v84, %v90
    %v92 = vlaneseq
    %v93 = vshrl.u32 %v92, 7
    %v94 = vsub.s32 %v47, %v93
    %v95 = vrot.slane %v87, %v94
    %v96 = vsel %vm56, %v95, %v91
    %v98 = vsel %vm59, %v96, 0.0
    %99 = vadd.xlane.f32.xlu0 %v98
    %v100 = vpop.xlane.xlu0 %99
    %vm101 = vcmask 64512
    %v102 = vsel %vm101, %v91, 0
    %104 = vmatprep.subr.mxu0 0.0
    %v105 = vand.u32 %v26, 4294901760
    %106 = vmatpush1.msra.mxu0 %v105
    %107 = vmatprep.subr.mxu0 0.0
    %108 = vmatpush1.msra.mxu0 0.0
    %109 = vmatprep.subr.mxu0 0.0
    %110 = vmatpush1.msra.mxu0 0.0
    %111 = vmatprep.subr.mxu0 0.0
    %112 = vmatpush1.msra.mxu0 0.0
    %113 = vmatprep.subr.mxu0 0.0
    %114 = vmatpush1.msra.mxu0 0.0
    %115 = vmatprep.subr.mxu0 0.0
    %116 = vmatpush1.msra.mxu0 0.0
    %117 = vmatprep.subr.mxu0 0.0
    %118 = vmatpush1.msra.mxu0 0.0
    %119 = vmatprep.subr.mxu0 0.0
    %120 = vmatpush1.msra.mxu0 0.0
    %121 = vmatprep.subr.mxu0 0.0
    %122 = vmatpush1.msra.mxu0 0.0
    %123 = vmatprep.subr.mxu0 0.0
    %124 = vmatpush1.msra.mxu0 0.0
    %125 = vmatprep.subr.mxu0 0.0
    %126 = vmatpush1.msra.mxu0 0.0
    %127 = vmatprep.subr.mxu0 0.0
    %128 = vmatpush1.msra.mxu0 0.0
    %129 = vmatprep.subr.mxu0 0.0
    %130 = vmatpush1.msra.mxu0 0.0
    %131 = vmatprep.subr.mxu0 0.0
    %132 = vmatpush1.msra.mxu0 0.0
    %133 = vmatprep.subr.mxu0 0.0
    %134 = vmatpush1.msra.mxu0 0.0
    %135 = vmatprep.subr.mxu0 0.0
    %136 = vmatpush1.msra.mxu0 0.0
    %137 = vmatprep.subr.mxu0 0.0
    %138 = vmatpush1.msra.mxu0 0.0
    %139 = vmatprep.subr.mxu0 0.0
    %140 = vmatpush1.msra.mxu0 0.0
    %141 = vmatprep.subr.mxu0 0.0
    %142 = vmatpush1.msra.mxu0 0.0
    %143 = vmatprep.subr.mxu0 0.0
    %144 = vmatpush1.msra.mxu0 0.0
    %145 = vmatprep.subr.mxu0 0.0
    %146 = vmatpush1.msra.mxu0 0.0
    %147 = vmatprep.subr.mxu0 0.0
    %148 = vmatpush1.msra.mxu0 0.0
    %149 = vmatprep.subr.mxu0 0.0
    %150 = vmatpush1.msra.mxu0 0.0
    %151 = vmatprep.subr.mxu0 0.0
    %152 = vmatpush1.msra.mxu0 0.0
    %153 = vmatprep.subr.mxu0 0.0
    %154 = vmatpush1.msra.mxu0 0.0
    %155 = vmatprep.subr.mxu0 0.0
    %156 = vmatpush1.msra.mxu0 0.0
    %157 = vmatprep.subr.mxu0 0.0
    %158 = vmatpush1.msra.mxu0 0.0
    %159 = vmatprep.subr.mxu0 0.0
    %160 = vmatpush1.msra.mxu0 0.0
    %161 = vmatprep.subr.mxu0 0.0
    %162 = vmatpush1.msra.mxu0 0.0
    %163 = vmatprep.subr.mxu0 0.0
    %164 = vmatpush1.msra.mxu0 0.0
    %165 = vmatprep.subr.mxu0 0.0
    %166 = vmatpush1.msra.mxu0 0.0
    %167 = vmatprep.subr.mxu0 0.0
    %168 = vmatpush1.msra.mxu0 0.0
    %169 = vmatprep.mubr.f32.mxu0 0.0
    %v170 = vand.u32 %v102, 4294901760
    %v171 = vsub.f32 %v102, %v170
    %v172 = vand.u32 %v171, 4294901760
    %v173 = vsub.f32 %v171, %v172
    %v174 = vand.u32 %v173, 4294901760
    %175 = vmatmul.mubr.f32.gmra.mrb[0].mxu0 %v174
    %v176 = vpop.f32.mrb[0].mxu0
    %v177 = vadd.f32 0.0, %v176
    %v178 = vpop.f32.mrb[0].mxu0
    %179 = vdwg.mxu0
    %180 = vmatprep.subr.mxu0 0.0
    %v181 = vand.u32 %v26, 4294901760
    %v182 = vsub.f32 %v26, %v181
    %v183 = vand.u32 %v182, 4294901760
    %v184 = vsub.f32 %v182, %v183
    %v185 = vand.u32 %v184, 4294901760
    %186 = vmatpush1.msra.mxu0 %v185
    %187 = vmatprep.subr.mxu0 0.0
    %188 = vmatpush1.msra.mxu0 0.0
    %189 = vmatprep.subr.mxu0 0.0
    %190 = vmatpush1.msra.mxu0 0.0
    %191 = vmatprep.subr.mxu0 0.0
    %192 = vmatpush1.msra.mxu0 0.0
    %193 = vmatprep.subr.mxu0 0.0
    %194 = vmatpush1.msra.mxu0 0.0
    %195 = vmatprep.subr.mxu0 0.0
    %196 = vmatpush1.msra.mxu0 0.0
    %197 = vmatprep.subr.mxu0 0.0
    %198 = vmatpush1.msra.mxu0 0.0
    %199 = vmatprep.subr.mxu0 0.0
    %200 = vmatpush1.msra.mxu0 0.0
    %201 = vmatprep.subr.mxu0 0.0
    %202 = vmatpush1.msra.mxu0 0.0
    %203 = vmatprep.subr.mxu0 0.0
    %204 = vmatpush1.msra.mxu0 0.0
    %205 = vmatprep.subr.mxu0 0.0
    %206 = vmatpush1.msra.mxu0 0.0
    %207 = vmatprep.subr.mxu0 0.0
    %208 = vmatpush1.msra.mxu0 0.0
    %209 = vmatprep.subr.mxu0 0.0
    %210 = vmatpush1.msra.mxu0 0.0
    %211 = vmatprep.subr.mxu0 0.0
    %212 = vmatpush1.msra.mxu0 0.0
    %213 = vmatprep.subr.mxu0 0.0
    %214 = vmatpush1.msra.mxu0 0.0
    %215 = vmatprep.subr.mxu0 0.0
    %216 = vmatpush1.msra.mxu0 0.0
    %217 = vmatprep.subr.mxu0 0.0
    %218 = vmatpush1.msra.mxu0 0.0
    %219 = vmatprep.subr.mxu0 0.0
    %220 = vmatpush1.msra.mxu0 0.0
    %221 = vmatprep.subr.mxu0 0.0
    %222 = vmatpush1.msra.mxu0 0.0
    %223 = vmatprep.subr.mxu0 0.0
    %224 = vmatpush1.msra.mxu0 0.0
    %225 = vmatprep.subr.mxu0 0.0
    %226 = vmatpush1.msra.mxu0 0.0
    %227 = vmatprep.subr.mxu0 0.0
    %228 = vmatpush1.msra.mxu0 0.0
    %229 = vmatprep.subr.mxu0 0.0
    %230 = vmatpush1.msra.mxu0 0.0
    %231 = vmatprep.subr.mxu0 0.0
    %232 = vmatpush1.msra.mxu0 0.0
    %233 = vmatprep.subr.mxu0 0.0
    %234 = vmatpush1.msra.mxu0 0.0
    %235 = vmatprep.subr.mxu0 0.0
    %236 = vmatpush1.msra.mxu0 0.0
    %237 = vmatprep.subr.mxu0 0.0
    %238 = vmatpush1.msra.mxu0 0.0
    %239 = vmatprep.subr.mxu0 0.0
    %240 = vmatpush1.msra.mxu0 0.0
    %241 = vmatprep.subr.mxu0 0.0
    %242 = vmatpush1.msra.mxu0 0.0
    %243 = vmatprep.subr.mxu0 0.0
    %244 = vmatpush1.msra.mxu0 0.0
    %245 = vmatprep.subr.mxu0 0.0
    %246 = vmatpush1.msra.mxu0 0.0
    %247 = vmatprep.subr.mxu0 0.0
    %248 = vmatpush1.msra.mxu0 0.0
    %249 = vmatprep.mubr.f32.mxu0 0.0
    %v250 = vand.u32 %v102, 4294901760
    %251 = vmatmul.mubr.f32.gmra.mrb[0].mxu0 %v250
    %v252 = vpop.f32.mrb[0].mxu0
    %v253 = vadd.f32 %v177, %v252
    %v254 = vpop.f32.mrb[0].mxu0
    %255 = vdwg.mxu0
    %256 = vmatprep.subr.mxu0 0.0
    %v257 = vand.u32 %v26, 4294901760
    %v258 = vsub.f32 %v26, %v257
    %259 = vmatpush1.msra.mxu0 %v258
    %260 = vmatprep.subr.mxu0 0.0
    %261 = vmatpush1.msra.mxu0 0.0
    %262 = vmatprep.subr.mxu0 0.0
    %263 = vmatpush1.msra.mxu0 0.0
    %264 = vmatprep.subr.mxu0 0.0
    %265 = vmatpush1.msra.mxu0 0.0
    %266 = vmatprep.subr.mxu0 0.0
    %267 = vmatpush1.msra.mxu0 0.0
    %268 = vmatprep.subr.mxu0 0.0
    %269 = vmatpush1.msra.mxu0 0.0
    %270 = vmatprep.subr.mxu0 0.0
    %271 = vmatpush1.msra.mxu0 0.0
    %272 = vmatprep.subr.mxu0 0.0
    %273 = vmatpush1.msra.mxu0 0.0
    %274 = vmatprep.subr.mxu0 0.0
    %275 = vmatpush1.msra.mxu0 0.0
    %276 = vmatprep.subr.mxu0 0.0
    %277 = vmatpush1.msra.mxu0 0.0
    %278 = vmatprep.subr.mxu0 0.0
    %279 = vmatpush1.msra.mxu0 0.0
    %280 = vmatprep.subr.mxu0 0.0
    %281 = vmatpush1.msra.mxu0 0.0
    %282 = vmatprep.subr.mxu0 0.0
    %283 = vmatpush1.msra.mxu0 0.0
    %284 = vmatprep.subr.mxu0 0.0
    %285 = vmatpush1.msra.mxu0 0.0
    %286 = vmatprep.subr.mxu0 0.0
    %287 = vmatpush1.msra.mxu0 0.0
    %288 = vmatprep.subr.mxu0 0.0
    %289 = vmatpush1.msra.mxu0 0.0
    %290 = vmatprep.subr.mxu0 0.0
    %291 = vmatpush1.msra.mxu0 0.0
    %292 = vmatprep.subr.mxu0 0.0
    %293 = vmatpush1.msra.mxu0 0.0
    %294 = vmatprep.subr.mxu0 0.0
    %295 = vmatpush1.msra.mxu0 0.0
    %296 = vmatprep.subr.mxu0 0.0
    %297 = vmatpush1.msra.mxu0 0.0
    %298 = vmatprep.subr.mxu0 0.0
    %299 = vmatpush1.msra.mxu0 0.0
    %300 = vmatprep.subr.mxu0 0.0
    %301 = vmatpush1.msra.mxu0 0.0
    %302 = vmatprep.subr.mxu0 0.0
    %303 = vmatpush1.msra.mxu0 0.0
    %304 = vmatprep.subr.mxu0 0.0
    %305 = vmatpush1.msra.mxu0 0.0
    %306 = vmatprep.subr.mxu0 0.0
    %307 = vmatpush1.msra.mxu0 0.0
    %308 = vmatprep.subr.mxu0 0.0
    %309 = vmatpush1.msra.mxu0 0.0
    %310 = vmatprep.subr.mxu0 0.0
    %311 = vmatpush1.msra.mxu0 0.0
    %312 = vmatprep.subr.mxu0 0.0
    %313 = vmatpush1.msra.mxu0 0.0
    %314 = vmatprep.subr.mxu0 0.0
    %315 = vmatpush1.msra.mxu0 0.0
    %316 = vmatprep.subr.mxu0 0.0
    %317 = vmatpush1.msra.mxu0 0.0
    %318 = vmatprep.subr.mxu0 0.0
    %319 = vmatpush1.msra.mxu0 0.0
    %320 = vmatprep.subr.mxu0 0.0
    %321 = vmatpush1.msra.mxu0 0.0
    %322 = vmatprep.mubr.f32.mxu0 0.0
    %v323 = vand.u32 %v102, 4294901760
    %v324 = vsub.f32 %v102, %v323
    %325 = vmatmul.mubr.f32.gmra.mrb[0].mxu0 %v324
    %v326 = vpop.f32.mrb[0].mxu0
    %v327 = vadd.f32 %v253, %v326
    %v328 = vpop.f32.mrb[0].mxu0
    %329 = vdwg.mxu0
    %330 = vmatprep.subr.mxu0 0.0
    %v331 = vand.u32 %v26, 4294901760
    %332 = vmatpush1.msra.mxu0 %v331
    %333 = vmatprep.subr.mxu0 0.0
    %334 = vmatpush1.msra.mxu0 0.0
    %335 = vmatprep.subr.mxu0 0.0
    %336 = vmatpush1.msra.mxu0 0.0
    %337 = vmatprep.subr.mxu0 0.0
    %338 = vmatpush1.msra.mxu0 0.0
    %339 = vmatprep.subr.mxu0 0.0
    %340 = vmatpush1.msra.mxu0 0.0
    %341 = vmatprep.subr.mxu0 0.0
    %342 = vmatpush1.msra.mxu0 0.0
    %343 = vmatprep.subr.mxu0 0.0
    %344 = vmatpush1.msra.mxu0 0.0
    %345 = vmatprep.subr.mxu0 0.0
    %346 = vmatpush1.msra.mxu0 0.0
    %347 = vmatprep.subr.mxu0 0.0
    %348 = vmatpush1.msra.mxu0 0.0
    %349 = vmatprep.subr.mxu0 0.0
    %350 = vmatpush1.msra.mxu0 0.0
    %351 = vmatprep.subr.mxu0 0.0
    %352 = vmatpush1.msra.mxu0 0.0
    %353 = vmatprep.subr.mxu0 0.0
    %354 = vmatpush1.msra.mxu0 0.0
    %355 = vmatprep.subr.mxu0 0.0
    %356 = vmatpush1.msra.mxu0 0.0
    %357 = vmatprep.subr.mxu0 0.0
    %358 = vmatpush1.msra.mxu0 0.0
    %359 = vmatprep.subr.mxu0 0.0
    %360 = vmatpush1.msra.mxu0 0.0
    %361 = vmatprep.subr.mxu0 0.0
    %362 = vmatpush1.msra.mxu0 0.0
    %363 = vmatprep.subr.mxu0 0.0
    %364 = vmatpush1.msra.mxu0 0.0
    %365 = vmatprep.subr.mxu0 0.0
    %366 = vmatpush1.msra.mxu0 0.0
    %367 = vmatprep.subr.mxu0 0.0
    %368 = vmatpush1.msra.mxu0 0.0
    %369 = vmatprep.subr.mxu0 0.0
    %370 = vmatpush1.msra.mxu0 0.0
    %371 = vmatprep.subr.mxu0 0.0
    %372 = vmatpush1.msra.mxu0 0.0
    %373 = vmatprep.subr.mxu0 0.0
    %374 = vmatpush1.msra.mxu0 0.0
    %375 = vmatprep.subr.mxu0 0.0
    %376 = vmatpush1.msra.mxu0 0.0
    %377 = vmatprep.subr.mxu0 0.0
    %378 = vmatpush1.msra.mxu0 0.0
    %379 = vmatprep.subr.mxu0 0.0
    %380 = vmatpush1.msra.mxu0 0.0
    %381 = vmatprep.subr.mxu0 0.0
    %382 = vmatpush1.msra.mxu0 0.0
    %383 = vmatprep.subr.mxu0 0.0
    %384 = vmatpush1.msra.mxu0 0.0
    %385 = vmatprep.subr.mxu0 0.0
    %386 = vmatpush1.msra.mxu0 0.0
    %387 = vmatprep.subr.mxu0 0.0
    %388 = vmatpush1.msra.mxu0 0.0
    %389 = vmatprep.subr.mxu0 0.0
    %390 = vmatpush1.msra.mxu0 0.0
    %391 = vmatprep.subr.mxu0 0.0
    %392 = vmatpush1.msra.mxu0 0.0
    %393 = vmatprep.subr.mxu0 0.0
    %394 = vmatpush1.msra.mxu0 0.0
    %395 = vmatprep.mubr.f32.mxu0 0.0
    %v396 = vand.u32 %v102, 4294901760
    %v397 = vsub.f32 %v102, %v396
    %v398 = vand.u32 %v397, 4294901760
    %399 = vmatmul.mubr.f32.gmra.mrb[0].mxu0 %v398
    %v400 = vpop.f32.mrb[0].mxu0
    %v401 = vadd.f32 %v327, %v400
    %v402 = vpop.f32.mrb[0].mxu0
    %403 = vdwg.mxu0
    %404 = vmatprep.subr.mxu0 0.0
    %v405 = vand.u32 %v26, 4294901760
    %v406 = vsub.f32 %v26, %v405
    %v407 = vand.u32 %v406, 4294901760
    %408 = vmatpush1.msra.mxu0 %v407
    %409 = vmatprep.subr.mxu0 0.0
    %410 = vmatpush1.msra.mxu0 0.0
    %411 = vmatprep.subr.mxu0 0.0
    %412 = vmatpush1.msra.mxu0 0.0
    %413 = vmatprep.subr.mxu0 0.0
    %414 = vmatpush1.msra.mxu0 0.0
    %415 = vmatprep.subr.mxu0 0.0
    %416 = vmatpush1.msra.mxu0 0.0
    %417 = vmatprep.subr.mxu0 0.0
    %418 = vmatpush1.msra.mxu0 0.0
    %419 = vmatprep.subr.mxu0 0.0
    %420 = vmatpush1.msra.mxu0 0.0
    %421 = vmatprep.subr.mxu0 0.0
    %422 = vmatpush1.msra.mxu0 0.0
    %423 = vmatprep.subr.mxu0 0.0
    %424 = vmatpush1.msra.mxu0 0.0
    %425 = vmatprep.subr.mxu0 0.0
    %426 = vmatpush1.msra.mxu0 0.0
    %427 = vmatprep.subr.mxu0 0.0
    %428 = vmatpush1.msra.mxu0 0.0
    %429 = vmatprep.subr.mxu0 0.0
    %430 = vmatpush1.msra.mxu0 0.0
    %431 = vmatprep.subr.mxu0 0.0
    %432 = vmatpush1.msra.mxu0 0.0
    %433 = vmatprep.subr.mxu0 0.0
    %434 = vmatpush1.msra.mxu0 0.0
    %435 = vmatprep.subr.mxu0 0.0
    %436 = vmatpush1.msra.mxu0 0.0
    %437 = vmatprep.subr.mxu0 0.0
    %438 = vmatpush1.msra.mxu0 0.0
    %439 = vmatprep.subr.mxu0 0.0
    %440 = vmatpush1.msra.mxu0 0.0
    %441 = vmatprep.subr.mxu0 0.0
    %442 = vmatpush1.msra.mxu0 0.0
    %443 = vmatprep.subr.mxu0 0.0
    %444 = vmatpush1.msra.mxu0 0.0
    %445 = vmatprep.subr.mxu0 0.0
    %446 = vmatpush1.msra.mxu0 0.0
    %447 = vmatprep.subr.mxu0 0.0
    %448 = vmatpush1.msra.mxu0 0.0
    %449 = vmatprep.subr.mxu0 0.0
    %450 = vmatpush1.msra.mxu0 0.0
    %451 = vmatprep.subr.mxu0 0.0
    %452 = vmatpush1.msra.mxu0 0.0
    %453 = vmatprep.subr.mxu0 0.0
    %454 = vmatpush1.msra.mxu0 0.0
    %455 = vmatprep.subr.mxu0 0.0
    %456 = vmatpush1.msra.mxu0 0.0
    %457 = vmatprep.subr.mxu0 0.0
    %458 = vmatpush1.msra.mxu0 0.0
    %459 = vmatprep.subr.mxu0 0.0
    %460 = vmatpush1.msra.mxu0 0.0
    %461 = vmatprep.subr.mxu0 0.0
    %462 = vmatpush1.msra.mxu0 0.0
    %463 = vmatprep.subr.mxu0 0.0
    %464 = vmatpush1.msra.mxu0 0.0
    %465 = vmatprep.subr.mxu0 0.0
    %466 = vmatpush1.msra.mxu0 0.0
    %467 = vmatprep.subr.mxu0 0.0
    %468 = vmatpush1.msra.mxu0 0.0
    %469 = vmatprep.subr.mxu0 0.0
    %470 = vmatpush1.msra.mxu0 0.0
    %471 = vmatprep.mubr.f32.mxu0 0.0
    %v472 = vand.u32 %v102, 4294901760
    %473 = vmatmul.mubr.f32.gmra.mrb[0].mxu0 %v472
    %v474 = vpop.f32.mrb[0].mxu0
    %v475 = vadd.f32 %v401, %v474
    %v476 = vpop.f32.mrb[0].mxu0
    %477 = vdwg.mxu0
    %478 = vmatprep.subr.mxu0 0.0
    %v479 = vand.u32 %v26, 4294901760
    %480 = vmatpush1.msra.mxu0 %v479
    %481 = vmatprep.subr.mxu0 0.0
    %482 = vmatpush1.msra.mxu0 0.0
    %483 = vmatprep.subr.mxu0 0.0
    %484 = vmatpush1.msra.mxu0 0.0
    %485 = vmatprep.subr.mxu0 0.0
    %486 = vmatpush1.msra.mxu0 0.0
    %487 = vmatprep.subr.mxu0 0.0
    %488 = vmatpush1.msra.mxu0 0.0
    %489 = vmatprep.subr.mxu0 0.0
    %490 = vmatpush1.msra.mxu0 0.0
    %491 = vmatprep.subr.mxu0 0.0
    %492 = vmatpush1.msra.mxu0 0.0
    %493 = vmatprep.subr.mxu0 0.0
    %494 = vmatpush1.msra.mxu0 0.0
    %495 = vmatprep.subr.mxu0 0.0
    %496 = vmatpush1.msra.mxu0 0.0
    %497 = vmatprep.subr.mxu0 0.0
    %498 = vmatpush1.msra.mxu0 0.0
    %499 = vmatprep.subr.mxu0 0.0
    %500 = vmatpush1.msra.mxu0 0.0
    %501 = vmatprep.subr.mxu0 0.0
    %502 = vmatpush1.msra.mxu0 0.0
    %503 = vmatprep.subr.mxu0 0.0
    %504 = vmatpush1.msra.mxu0 0.0
    %505 = vmatprep.subr.mxu0 0.0
    %506 = vmatpush1.msra.mxu0 0.0
    %507 = vmatprep.subr.mxu0 0.0
    %508 = vmatpush1.msra.mxu0 0.0
    %509 = vmatprep.subr.mxu0 0.0
    %510 = vmatpush1.msra.mxu0 0.0
    %511 = vmatprep.subr.mxu0 0.0
    %512 = vmatpush1.msra.mxu0 0.0
    %513 = vmatprep.subr.mxu0 0.0
    %514 = vmatpush1.msra.mxu0 0.0
    %515 = vmatprep.subr.mxu0 0.0
    %516 = vmatpush1.msra.mxu0 0.0
    %517 = vmatprep.subr.mxu0 0.0
    %518 = vmatpush1.msra.mxu0 0.0
    %519 = vmatprep.subr.mxu0 0.0
    %520 = vmatpush1.msra.mxu0 0.0
    %521 = vmatprep.subr.mxu0 0.0
    %522 = vmatpush1.msra.mxu0 0.0
    %523 = vmatprep.subr.mxu0 0.0
    %524 = vmatpush1.msra.mxu0 0.0
    %525 = vmatprep.subr.mxu0 0.0
    %526 = vmatpush1.msra.mxu0 0.0
    %527 = vmatprep.subr.mxu0 0.0
    %528 = vmatpush1.msra.mxu0 0.0
    %529 = vmatprep.subr.mxu0 0.0
    %530 = vmatpush1.msra.mxu0 0.0
    %531 = vmatprep.subr.mxu0 0.0
    %532 = vmatpush1.msra.mxu0 0.0
    %533 = vmatprep.subr.mxu0 0.0
    %534 = vmatpush1.msra.mxu0 0.0
    %535 = vmatprep.subr.mxu0 0.0
    %536 = vmatpush1.msra.mxu0 0.0
    %537 = vmatprep.subr.mxu0 0.0
    %538 = vmatpush1.msra.mxu0 0.0
    %539 = vmatprep.subr.mxu0 0.0
    %540 = vmatpush1.msra.mxu0 0.0
    %541 = vmatprep.subr.mxu0 0.0
    %542 = vmatpush1.msra.mxu0 0.0
    %543 = vmatprep.mubr.f32.mxu0 0.0
    %v544 = vand.u32 %v102, 4294901760
    %545 = vmatmul.mubr.f32.gmra.mrb[0].mxu0 %v544
    %v546 = vpop.f32.mrb[0].mxu0
    %v547 = vadd.f32 %v475, %v546
    %v548 = vpop.f32.mrb[0].mxu0
    %549 = vdwg.mxu0
    %v550 = vsel %vm101, %v95, 0
    %552 = vmatprep.subr.mxu0 0.0
    %v553 = vand.u32 %v27, 4294901760
    %554 = vmatpush1.msra.mxu0 %v553
    %555 = vmatprep.subr.mxu0 0.0
    %556 = vmatpush1.msra.mxu0 0.0
    %557 = vmatprep.subr.mxu0 0.0
    %558 = vmatpush1.msra.mxu0 0.0
    %559 = vmatprep.subr.mxu0 0.0
    %560 = vmatpush1.msra.mxu0 0.0
    %561 = vmatprep.subr.mxu0 0.0
    %562 = vmatpush1.msra.mxu0 0.0
    %563 = vmatprep.subr.mxu0 0.0
    %564 = vmatpush1.msra.mxu0 0.0
    %565 = vmatprep.subr.mxu0 0.0
    %566 = vmatpush1.msra.mxu0 0.0
    %567 = vmatprep.subr.mxu0 0.0
    %568 = vmatpush1.msra.mxu0 0.0
    %569 = vmatprep.subr.mxu0 0.0
    %570 = vmatpush1.msra.mxu0 0.0
    %571 = vmatprep.subr.mxu0 0.0
    %572 = vmatpush1.msra.mxu0 0.0
    %573 = vmatprep.subr.mxu0 0.0
    %574 = vmatpush1.msra.mxu0 0.0
    %575 = vmatprep.subr.mxu0 0.0
    %576 = vmatpush1.msra.mxu0 0.0
    %577 = vmatprep.subr.mxu0 0.0
    %578 = vmatpush1.msra.mxu0 0.0
    %579 = vmatprep.subr.mxu0 0.0
    %580 = vmatpush1.msra.mxu0 0.0
    %581 = vmatprep.subr.mxu0 0.0
    %582 = vmatpush1.msra.mxu0 0.0
    %583 = vmatprep.subr.mxu0 0.0
    %584 = vmatpush1.msra.mxu0 0.0
    %585 = vmatprep.subr.mxu0 0.0
    %586 = vmatpush1.msra.mxu0 0.0
    %587 = vmatprep.subr.mxu0 0.0
    %588 = vmatpush1.msra.mxu0 0.0
    %589 = vmatprep.subr.mxu0 0.0
    %590 = vmatpush1.msra.mxu0 0.0
    %591 = vmatprep.subr.mxu0 0.0
    %592 = vmatpush1.msra.mxu0 0.0
    %593 = vmatprep.subr.mxu0 0.0
    %594 = vmatpush1.msra.mxu0 0.0
    %595 = vmatprep.subr.mxu0 0.0
    %596 = vmatpush1.msra.mxu0 0.0
    %597 = vmatprep.subr.mxu0 0.0
    %598 = vmatpush1.msra.mxu0 0.0
    %599 = vmatprep.subr.mxu0 0.0
    %600 = vmatpush1.msra.mxu0 0.0
    %601 = vmatprep.subr.mxu0 0.0
    %602 = vmatpush1.msra.mxu0 0.0
    %603 = vmatprep.subr.mxu0 0.0
    %604 = vmatpush1.msra.mxu0 0.0
    %605 = vmatprep.subr.mxu0 0.0
    %606 = vmatpush1.msra.mxu0 0.0
    %607 = vmatprep.subr.mxu0 0.0
    %608 = vmatpush1.msra.mxu0 0.0
    %609 = vmatprep.subr.mxu0 0.0
    %610 = vmatpush1.msra.mxu0 0.0
    %611 = vmatprep.subr.mxu0 0.0
    %612 = vmatpush1.msra.mxu0 0.0
    %613 = vmatprep.subr.mxu0 0.0
    %614 = vmatpush1.msra.mxu0 0.0
    %615 = vmatprep.subr.mxu0 0.0
    %616 = vmatpush1.msra.mxu0 0.0
    %617 = vmatprep.mubr.f32.mxu0 0.0
    %v618 = vand.u32 %v550, 4294901760
    %v619 = vsub.f32 %v550, %v618
    %v620 = vand.u32 %v619, 4294901760
    %v621 = vsub.f32 %v619, %v620
    %v622 = vand.u32 %v621, 4294901760
    %623 = vmatmul.mubr.f32.gmra.mrb[0].mxu0 %v622
    %v624 = vpop.f32.mrb[0].mxu0
    %v625 = vadd.f32 0.0, %v624
    %v626 = vpop.f32.mrb[0].mxu0
    %627 = vdwg.mxu0
    %628 = vmatprep.subr.mxu0 0.0
    %v629 = vand.u32 %v27, 4294901760
    %v630 = vsub.f32 %v27, %v629
    %v631 = vand.u32 %v630, 4294901760
    %v632 = vsub.f32 %v630, %v631
    %v633 = vand.u32 %v632, 4294901760
    %634 = vmatpush1.msra.mxu0 %v633
    %635 = vmatprep.subr.mxu0 0.0
    %636 = vmatpush1.msra.mxu0 0.0
    %637 = vmatprep.subr.mxu0 0.0
    %638 = vmatpush1.msra.mxu0 0.0
    %639 = vmatprep.subr.mxu0 0.0
    %640 = vmatpush1.msra.mxu0 0.0
    %641 = vmatprep.subr.mxu0 0.0
    %642 = vmatpush1.msra.mxu0 0.0
    %643 = vmatprep.subr.mxu0 0.0
    %644 = vmatpush1.msra.mxu0 0.0
    %645 = vmatprep.subr.mxu0 0.0
    %646 = vmatpush1.msra.mxu0 0.0
    %647 = vmatprep.subr.mxu0 0.0
    %648 = vmatpush1.msra.mxu0 0.0
    %649 = vmatprep.subr.mxu0 0.0
    %650 = vmatpush1.msra.mxu0 0.0
    %651 = vmatprep.subr.mxu0 0.0
    %652 = vmatpush1.msra.mxu0 0.0
    %653 = vmatprep.subr.mxu0 0.0
    %654 = vmatpush1.msra.mxu0 0.0
    %655 = vmatprep.subr.mxu0 0.0
    %656 = vmatpush1.msra.mxu0 0.0
    %657 = vmatprep.subr.mxu0 0.0
    %658 = vmatpush1.msra.mxu0 0.0
    %659 = vmatprep.subr.mxu0 0.0
    %660 = vmatpush1.msra.mxu0 0.0
    %661 = vmatprep.subr.mxu0 0.0
    %662 = vmatpush1.msra.mxu0 0.0
    %663 = vmatprep.subr.mxu0 0.0
    %664 = vmatpush1.msra.mxu0 0.0
    %665 = vmatprep.subr.mxu0 0.0
    %666 = vmatpush1.msra.mxu0 0.0
    %667 = vmatprep.subr.mxu0 0.0
    %668 = vmatpush1.msra.mxu0 0.0
    %669 = vmatprep.subr.mxu0 0.0
    %670 = vmatpush1.msra.mxu0 0.0
    %671 = vmatprep.subr.mxu0 0.0
    %672 = vmatpush1.msra.mxu0 0.0
    %673 = vmatprep.subr.mxu0 0.0
    %674 = vmatpush1.msra.mxu0 0.0
    %675 = vmatprep.subr.mxu0 0.0
    %676 = vmatpush1.msra.mxu0 0.0
    %677 = vmatprep.subr.mxu0 0.0
    %678 = vmatpush1.msra.mxu0 0.0
    %679 = vmatprep.subr.mxu0 0.0
    %680 = vmatpush1.msra.mxu0 0.0
    %681 = vmatprep.subr.mxu0 0.0
    %682 = vmatpush1.msra.mxu0 0.0
    %683 = vmatprep.subr.mxu0 0.0
    %684 = vmatpush1.msra.mxu0 0.0
    %685 = vmatprep.subr.mxu0 0.0
    %686 = vmatpush1.msra.mxu0 0.0
    %687 = vmatprep.subr.mxu0 0.0
    %688 = vmatpush1.msra.mxu0 0.0
    %689 = vmatprep.subr.mxu0 0.0
    %690 = vmatpush1.msra.mxu0 0.0
    %691 = vmatprep.subr.mxu0 0.0
    %692 = vmatpush1.msra.mxu0 0.0
    %693 = vmatprep.subr.mxu0 0.0
    %694 = vmatpush1.msra.mxu0 0.0
    %695 = vmatprep.subr.mxu0 0.0
    %696 = vmatpush1.msra.mxu0 0.0
    %697 = vmatprep.mubr.f32.mxu0 0.0
    %v698 = vand.u32 %v550, 4294901760
    %699 = vmatmul.mubr.f32.gmra.mrb[0].mxu0 %v698
    %v700 = vpop.f32.mrb[0].mxu0
    %v701 = vadd.f32 %v625, %v700
    %v702 = vpop.f32.mrb[0].mxu0
    %703 = vdwg.mxu0
    %704 = vmatprep.subr.mxu0 0.0
    %v705 = vand.u32 %v27, 4294901760
    %v706 = vsub.f32 %v27, %v705
    %707 = vmatpush1.msra.mxu0 %v706
    %708 = vmatprep.subr.mxu0 0.0
    %709 = vmatpush1.msra.mxu0 0.0
    %710 = vmatprep.subr.mxu0 0.0
    %711 = vmatpush1.msra.mxu0 0.0
    %712 = vmatprep.subr.mxu0 0.0
    %713 = vmatpush1.msra.mxu0 0.0
    %714 = vmatprep.subr.mxu0 0.0
    %715 = vmatpush1.msra.mxu0 0.0
    %716 = vmatprep.subr.mxu0 0.0
    %717 = vmatpush1.msra.mxu0 0.0
    %718 = vmatprep.subr.mxu0 0.0
    %719 = vmatpush1.msra.mxu0 0.0
    %720 = vmatprep.subr.mxu0 0.0
    %721 = vmatpush1.msra.mxu0 0.0
    %722 = vmatprep.subr.mxu0 0.0
    %723 = vmatpush1.msra.mxu0 0.0
    %724 = vmatprep.subr.mxu0 0.0
    %725 = vmatpush1.msra.mxu0 0.0
    %726 = vmatprep.subr.mxu0 0.0
    %727 = vmatpush1.msra.mxu0 0.0
    %728 = vmatprep.subr.mxu0 0.0
    %729 = vmatpush1.msra.mxu0 0.0
    %730 = vmatprep.subr.mxu0 0.0
    %731 = vmatpush1.msra.mxu0 0.0
    %732 = vmatprep.subr.mxu0 0.0
    %733 = vmatpush1.msra.mxu0 0.0
    %734 = vmatprep.subr.mxu0 0.0
    %735 = vmatpush1.msra.mxu0 0.0
    %736 = vmatprep.subr.mxu0 0.0
    %737 = vmatpush1.msra.mxu0 0.0
    %738 = vmatprep.subr.mxu0 0.0
    %739 = vmatpush1.msra.mxu0 0.0
    %740 = vmatprep.subr.mxu0 0.0
    %741 = vmatpush1.msra.mxu0 0.0
    %742 = vmatprep.subr.mxu0 0.0
    %743 = vmatpush1.msra.mxu0 0.0
    %744 = vmatprep.subr.mxu0 0.0
    %745 = vmatpush1.msra.mxu0 0.0
    %746 = vmatprep.subr.mxu0 0.0
    %747 = vmatpush1.msra.mxu0 0.0
    %748 = vmatprep.subr.mxu0 0.0
    %749 = vmatpush1.msra.mxu0 0.0
    %750 = vmatprep.subr.mxu0 0.0
    %751 = vmatpush1.msra.mxu0 0.0
    %752 = vmatprep.subr.mxu0 0.0
    %753 = vmatpush1.msra.mxu0 0.0
    %754 = vmatprep.subr.mxu0 0.0
    %755 = vmatpush1.msra.mxu0 0.0
    %756 = vmatprep.subr.mxu0 0.0
    %757 = vmatpush1.msra.mxu0 0.0
    %758 = vmatprep.subr.mxu0 0.0
    %759 = vmatpush1.msra.mxu0 0.0
    %760 = vmatprep.subr.mxu0 0.0
    %761 = vmatpush1.msra.mxu0 0.0
    %762 = vmatprep.subr.mxu0 0.0
    %763 = vmatpush1.msra.mxu0 0.0
    %764 = vmatprep.subr.mxu0 0.0
    %765 = vmatpush1.msra.mxu0 0.0
    %766 = vmatprep.subr.mxu0 0.0
    %767 = vmatpush1.msra.mxu0 0.0
    %768 = vmatprep.subr.mxu0 0.0
    %769 = vmatpush1.msra.mxu0 0.0
    %770 = vmatprep.mubr.f32.mxu0 0.0
    %v771 = vand.u32 %v550, 4294901760
    %v772 = vsub.f32 %v550, %v771
    %773 = vmatmul.mubr.f32.gmra.mrb[0].mxu0 %v772
    %v774 = vpop.f32.mrb[0].mxu0
    %v775 = vadd.f32 %v701, %v774
    %v776 = vpop.f32.mrb[0].mxu0
    %777 = vdwg.mxu0
    %778 = vmatprep.subr.mxu0 0.0
    %v779 = vand.u32 %v27, 4294901760
    %780 = vmatpush1.msra.mxu0 %v779
    %781 = vmatprep.subr.mxu0 0.0
    %782 = vmatpush1.msra.mxu0 0.0
    %783 = vmatprep.subr.mxu0 0.0
    %784 = vmatpush1.msra.mxu0 0.0
    %785 = vmatprep.subr.mxu0 0.0
    %786 = vmatpush1.msra.mxu0 0.0
    %787 = vmatprep.subr.mxu0 0.0
    %788 = vmatpush1.msra.mxu0 0.0
    %789 = vmatprep.subr.mxu0 0.0
    %790 = vmatpush1.msra.mxu0 0.0
    %791 = vmatprep.subr.mxu0 0.0
    %792 = vmatpush1.msra.mxu0 0.0
    %793 = vmatprep.subr.mxu0 0.0
    %794 = vmatpush1.msra.mxu0 0.0
    %795 = vmatprep.subr.mxu0 0.0
    %796 = vmatpush1.msra.mxu0 0.0
    %797 = vmatprep.subr.mxu0 0.0
    %798 = vmatpush1.msra.mxu0 0.0
    %799 = vmatprep.subr.mxu0 0.0
    %800 = vmatpush1.msra.mxu0 0.0
    %801 = vmatprep.subr.mxu0 0.0
    %802 = vmatpush1.msra.mxu0 0.0
    %803 = vmatprep.subr.mxu0 0.0
    %804 = vmatpush1.msra.mxu0 0.0
    %805 = vmatprep.subr.mxu0 0.0
    %806 = vmatpush1.msra.mxu0 0.0
    %807 = vmatprep.subr.mxu0 0.0
    %808 = vmatpush1.msra.mxu0 0.0
    %809 = vmatprep.subr.mxu0 0.0
    %810 = vmatpush1.msra.mxu0 0.0
    %811 = vmatprep.subr.mxu0 0.0
    %812 = vmatpush1.msra.mxu0 0.0
    %813 = vmatprep.subr.mxu0 0.0
    %814 = vmatpush1.msra.mxu0 0.0
    %815 = vmatprep.subr.mxu0 0.0
    %816 = vmatpush1.msra.mxu0 0.0
    %817 = vmatprep.subr.mxu0 0.0
    %818 = vmatpush1.msra.mxu0 0.0
    %819 = vmatprep.subr.mxu0 0.0
    %820 = vmatpush1.msra.mxu0 0.0
    %821 = vmatprep.subr.mxu0 0.0
    %822 = vmatpush1.msra.mxu0 0.0
    %823 = vmatprep.subr.mxu0 0.0
    %824 = vmatpush1.msra.mxu0 0.0
    %825 = vmatprep.subr.mxu0 0.0
    %826 = vmatpush1.msra.mxu0 0.0
    %827 = vmatprep.subr.mxu0 0.0
    %828 = vmatpush1.msra.mxu0 0.0
    %829 = vmatprep.subr.mxu0 0.0
    %830 = vmatpush1.msra.mxu0 0.0
    %831 = vmatprep.subr.mxu0 0.0
    %832 = vmatpush1.msra.mxu0 0.0
    %833 = vmatprep.subr.mxu0 0.0
    %834 = vmatpush1.msra.mxu0 0.0
    %835 = vmatprep.subr.mxu0 0.0
    %836 = vmatpush1.msra.mxu0 0.0
    %837 = vmatprep.subr.mxu0 0.0
    %838 = vmatpush1.msra.mxu0 0.0
    %839 = vmatprep.subr.mxu0 0.0
    %840 = vmatpush1.msra.mxu0 0.0
    %841 = vmatprep.subr.mxu0 0.0
    %842 = vmatpush1.msra.mxu0 0.0
    %843 = vmatprep.mubr.f32.mxu0 0.0
    %v844 = vand.u32 %v550, 4294901760
    %v845 = vsub.f32 %v550, %v844
    %v846 = vand.u32 %v845, 4294901760
    %847 = vmatmul.mubr.f32.gmra.mrb[0].mxu0 %v846
    %v848 = vpop.f32.mrb[0].mxu0
    %v849 = vadd.f32 %v775, %v848
    %v850 = vpop.f32.mrb[0].mxu0
    %851 = vdwg.mxu0
    %852 = vmatprep.subr.mxu0 0.0
    %v853 = vand.u32 %v27, 4294901760
    %v854 = vsub.f32 %v27, %v853
    %v855 = vand.u32 %v854, 4294901760
    %856 = vmatpush1.msra.mxu0 %v855
    %857 = vmatprep.subr.mxu0 0.0
    %858 = vmatpush1.msra.mxu0 0.0
    %859 = vmatprep.subr.mxu0 0.0
    %860 = vmatpush1.msra.mxu0 0.0
    %861 = vmatprep.subr.mxu0 0.0
    %862 = vmatpush1.msra.mxu0 0.0
    %863 = vmatprep.subr.mxu0 0.0
    %864 = vmatpush1.msra.mxu0 0.0
    %865 = vmatprep.subr.mxu0 0.0
    %866 = vmatpush1.msra.mxu0 0.0
    %867 = vmatprep.subr.mxu0 0.0
    %868 = vmatpush1.msra.mxu0 0.0
    %869 = vmatprep.subr.mxu0 0.0
    %870 = vmatpush1.msra.mxu0 0.0
    %871 = vmatprep.subr.mxu0 0.0
    %872 = vmatpush1.msra.mxu0 0.0
    %873 = vmatprep.subr.mxu0 0.0
    %874 = vmatpush1.msra.mxu0 0.0
    %875 = vmatprep.subr.mxu0 0.0
    %876 = vmatpush1.msra.mxu0 0.0
    %877 = vmatprep.subr.mxu0 0.0
    %878 = vmatpush1.msra.mxu0 0.0
    %879 = vmatprep.subr.mxu0 0.0
    %880 = vmatpush1.msra.mxu0 0.0
    %881 = vmatprep.subr.mxu0 0.0
    %882 = vmatpush1.msra.mxu0 0.0
    %883 = vmatprep.subr.mxu0 0.0
    %884 = vmatpush1.msra.mxu0 0.0
    %885 = vmatprep.subr.mxu0 0.0
    %886 = vmatpush1.msra.mxu0 0.0
    %887 = vmatprep.subr.mxu0 0.0
    %888 = vmatpush1.msra.mxu0 0.0
    %889 = vmatprep.subr.mxu0 0.0
    %890 = vmatpush1.msra.mxu0 0.0
    %891 = vmatprep.subr.mxu0 0.0
    %892 = vmatpush1.msra.mxu0 0.0
    %893 = vmatprep.subr.mxu0 0.0
    %894 = vmatpush1.msra.mxu0 0.0
    %895 = vmatprep.subr.mxu0 0.0
    %896 = vmatpush1.msra.mxu0 0.0
    %897 = vmatprep.subr.mxu0 0.0
    %898 = vmatpush1.msra.mxu0 0.0
    %899 = vmatprep.subr.mxu0 0.0
    %900 = vmatpush1.msra.mxu0 0.0
    %901 = vmatprep.subr.mxu0 0.0
    %902 = vmatpush1.msra.mxu0 0.0
    %903 = vmatprep.subr.mxu0 0.0
    %904 = vmatpush1.msra.mxu0 0.0
    %905 = vmatprep.subr.mxu0 0.0
    %906 = vmatpush1.msra.mxu0 0.0
    %907 = vmatprep.subr.mxu0 0.0
    %908 = vmatpush1.msra.mxu0 0.0
    %909 = vmatprep.subr.mxu0 0.0
    %910 = vmatpush1.msra.mxu0 0.0
    %911 = vmatprep.subr.mxu0 0.0
    %912 = vmatpush1.msra.mxu0 0.0
    %913 = vmatprep.subr.mxu0 0.0
    %914 = vmatpush1.msra.mxu0 0.0
    %915 = vmatprep.subr.mxu0 0.0
    %916 = vmatpush1.msra.mxu0 0.0
    %917 = vmatprep.subr.mxu0 0.0
    %918 = vmatpush1.msra.mxu0 0.0
    %919 = vmatprep.mubr.f32.mxu0 0.0
    %v920 = vand.u32 %v550, 4294901760
    %921 = vmatmul.mubr.f32.gmra.mrb[0].mxu0 %v920
    %v922 = vpop.f32.mrb[0].mxu0
    %v923 = vadd.f32 %v849, %v922
    %v924 = vpop.f32.mrb[0].mxu0
    %925 = vdwg.mxu0
    %926 = vmatprep.subr.mxu0 0.0
    %v927 = vand.u32 %v27, 4294901760
    %928 = vmatpush1.msra.mxu0 %v927
    %929 = vmatprep.subr.mxu0 0.0
    %930 = vmatpush1.msra.mxu0 0.0
    %931 = vmatprep.subr.mxu0 0.0
    %932 = vmatpush1.msra.mxu0 0.0
    %933 = vmatprep.subr.mxu0 0.0
    %934 = vmatpush1.msra.mxu0 0.0
    %935 = vmatprep.subr.mxu0 0.0
    %936 = vmatpush1.msra.mxu0 0.0
    %937 = vmatprep.subr.mxu0 0.0
    %938 = vmatpush1.msra.mxu0 0.0
    %939 = vmatprep.subr.mxu0 0.0
    %940 = vmatpush1.msra.mxu0 0.0
    %941 = vmatprep.subr.mxu0 0.0
    %942 = vmatpush1.msra.mxu0 0.0
    %943 = vmatprep.subr.mxu0 0.0
    %944 = vmatpush1.msra.mxu0 0.0
    %945 = vmatprep.subr.mxu0 0.0
    %946 = vmatpush1.msra.mxu0 0.0
    %947 = vmatprep.subr.mxu0 0.0
    %948 = vmatpush1.msra.mxu0 0.0
    %949 = vmatprep.subr.mxu0 0.0
    %950 = vmatpush1.msra.mxu0 0.0
    %951 = vmatprep.subr.mxu0 0.0
    %952 = vmatpush1.msra.mxu0 0.0
    %953 = vmatprep.subr.mxu0 0.0
    %954 = vmatpush1.msra.mxu0 0.0
    %955 = vmatprep.subr.mxu0 0.0
    %956 = vmatpush1.msra.mxu0 0.0
    %957 = vmatprep.subr.mxu0 0.0
    %958 = vmatpush1.msra.mxu0 0.0
    %959 = vmatprep.subr.mxu0 0.0
    %960 = vmatpush1.msra.mxu0 0.0
    %961 = vmatprep.subr.mxu0 0.0
    %962 = vmatpush1.msra.mxu0 0.0
    %963 = vmatprep.subr.mxu0 0.0
    %964 = vmatpush1.msra.mxu0 0.0
    %965 = vmatprep.subr.mxu0 0.0
    %966 = vmatpush1.msra.mxu0 0.0
    %967 = vmatprep.subr.mxu0 0.0
    %968 = vmatpush1.msra.mxu0 0.0
    %969 = vmatprep.subr.mxu0 0.0
    %970 = vmatpush1.msra.mxu0 0.0
    %971 = vmatprep.subr.mxu0 0.0
    %972 = vmatpush1.msra.mxu0 0.0
    %973 = vmatprep.subr.mxu0 0.0
    %974 = vmatpush1.msra.mxu0 0.0
    %975 = vmatprep.subr.mxu0 0.0
    %976 = vmatpush1.msra.mxu0 0.0
    %977 = vmatprep.subr.mxu0 0.0
    %978 = vmatpush1.msra.mxu0 0.0
    %979 = vmatprep.subr.mxu0 0.0
    %980 = vmatpush1.msra.mxu0 0.0
    %981 = vmatprep.subr.mxu0 0.0
    %982 = vmatpush1.msra.mxu0 0.0
    %983 = vmatprep.subr.mxu0 0.0
    %984 = vmatpush1.msra.mxu0 0.0
    %985 = vmatprep.subr.mxu0 0.0
    %986 = vmatpush1.msra.mxu0 0.0
    %987 = vmatprep.subr.mxu0 0.0
    %988 = vmatpush1.msra.mxu0 0.0
    %989 = vmatprep.subr.mxu0 0.0
    %990 = vmatpush1.msra.mxu0 0.0
    %991 = vmatprep.mubr.f32.mxu0 0.0
    %v992 = vand.u32 %v550, 4294901760
    %993 = vmatmul.mubr.f32.gmra.mrb[0].mxu0 %v992
    %v994 = vpop.f32.mrb[0].mxu0
    %v995 = vadd.f32 %v923, %v994
    %v996 = vpop.f32.mrb[0].mxu0
    %997 = vdwg.mxu0
    %v999 = vrot.slane %v100, 1
    %v1002 = vrcp.pop %v100
    %v1003 = vmul.f32 %v547, %v1002
    %v1004 = vrcp.pop %v999
    %v1005 = vmul.f32 %v995, %v1004
    %v1008 = vrot.slane %v1005, 7
    %v1009 = vsel %vm56, %v1008, %v1003
    %vm1011 = vcmask 254976
    %1012 = vst.msk [vmem:[#allocation5] sm:$0x3] %vm1011, %v1009
    // Predicated region
    $region14: #{tpu_custom_call.1} parent=1 // pred_check
      _
    $region15: #{tpu_custom_call.1} parent=1 // pred_check_branch
      %1014 = sbr.rel (0) target = $region17
    $region16: #{tpu_custom_call.1} parent=1 // pred_region
      %s1016 = ssub.s32 32, 32
      %1017 = vsyncadd [#allocation4], %s1016
      %s1019 = sshll.u32 [#allocation5], 4
      %s1020 = int_to_ptr.vmem [resolvable:$true] %s1019
      %1022 = dma.vmem_to_hbm [thread:$0]  %s1020, 32, %s2, [#allocation4]
    $region17: #{tpu_custom_call.1} parent=1 // pred_fallthru
      _
    // Predicated region
    $region18: #{tpu_custom_call.1} parent=1 // pred_check
      _
    $region19: #{tpu_custom_call.1} parent=1 // pred_check_branch
      %1024 = sbr.rel (0) target = $region21
    $region20: #{tpu_custom_call.1} parent=1 // pred_region
      %1025 = dma.done [#allocation4], 32
    $region21: #{tpu_custom_call.1} parent=1 // pred_fallthru
      _
    %1026 = vsyncpa [#allocation3], 1
    %1027 = vsyncpa [#allocation4], 1

</llo_original>
